<compile_context>
chip_gen: v6e
topology: v6e:2x2x1
jax: 0.10.0
libtpu: 0.0.40
codegen_flags: <defaults>
</compile_context>

<pallas_src>
import jax
import jax.numpy as jnp
from jax.experimental import pallas as pl
from jax.experimental.pallas import tpu as pltpu

_L = 128  # lane width; each interleaved row carries 128 samples


def _linear_sigmoid_kernel(x_ref, w_ref, b_ref, o_ref):
    # x_ref: VMEM (TM, 256) f32 -- interleaved [x0, x1, x0, x1, ...] lanes
    # w_ref: VMEM (256, 128) f32 -- constant deinterleave-and-weight matrix
    # b_ref: SMEM (1,)      f32 -- bias
    # o_ref: VMEM (TM, 128) f32 -- sublane+lane dense output tile
    y = jnp.dot(x_ref[...], w_ref[...], preferred_element_type=jnp.float32)
    y = y + b_ref[0]
    # Clamp so exp(-y) stays finite (sigmoid(-80) ~ 1.8e-35, indistinguishable
    # from the exact value in f32); avoids inf*0 -> nan in the Newton step.
    y = jnp.maximum(y, -80.0)
    t = jnp.exp(-y)                       # EUP
    d = 1.0 + t
    r = pl.reciprocal(d, approx=True)     # EUP vrcp, no divide
    o_ref[...] = r * (2.0 - d * r)        # one Newton step on VPU -> ~f32 accuracy


def linear_classifier_forward(x, weight, bias, *, max_tile_rows=4096):
    """x: (N, 2), weight: (1, 2), bias: (1,) -> (N, 1) f32 sigmoid(x @ w.T + b)."""
    n = x.shape[0]
    x = x.astype(jnp.float32)
    w = weight.reshape(2).astype(jnp.float32)
    b = bias.reshape(1).astype(jnp.float32)

    # Row tiling of the interleaved view: rows of 128 samples each.
    rows = -(-n // _L)                                   # ceil(n / 128)
    tile_rows = min(max_tile_rows, ((rows + 7) // 8) * 8)  # multiple of 8 sublanes
    rows_pad = ((rows + tile_rows - 1) // tile_rows) * tile_rows
    n_pad = rows_pad * _L

    # Interleaved, feature-last view of the row-major (N, 2) data: NO transpose.
    x_flat = x.reshape(-1)                               # (2N,) view
    if n_pad != n:
        x_flat = jnp.pad(x_flat, (0, 2 * (n_pad - n)))   # zeros -> sigmoid(b), sliced off
    x_il = x_flat.reshape(rows_pad, 2 * _L)              # (rows_pad, 256)

    # Constant deinterleave-and-weight matrix: W_big[2j, j] = w0, W_big[2j+1, j] = w1.
    eye = jnp.eye(_L, dtype=jnp.float32)
    w_big = jnp.stack([w[0] * eye, w[1] * eye], axis=1).reshape(2 * _L, _L)

    out = pl.pallas_call(
        _linear_sigmoid_kernel,
        out_shape=jax.ShapeDtypeStruct((rows_pad, _L), jnp.float32),
        grid_spec=pl.GridSpec(
            grid=(rows_pad // tile_rows,),
            in_specs=[
                # batch tile: TM rows x 256 interleaved lanes
                pl.BlockSpec((tile_rows, 2 * _L), lambda i: (i, 0)),
                # weight matrix: whole array, same block every step (fetched once)
                pl.BlockSpec((2 * _L, _L), lambda i: (0, 0)),
                # bias: tiny scalar in SMEM
                pl.BlockSpec(memory_space=pltpu.MemorySpace.SMEM),
            ],
            out_specs=pl.BlockSpec((tile_rows, _L), lambda i: (i, 0)),
        ),
        compiler_params=pltpu.CompilerParams(
            dimension_semantics=("parallel",),   # lets v7x megacore split the grid
        ),
    )(x_il, w_big, b)

    # Back to the PyTorch-facing (N, 1) layout: reshape is a view; the slice is
    # a no-op when n is a multiple of the tile size.  (A consumer that accepts
    # the flat (N,) / padded slab could skip even this.)
    y = out.reshape(-1)
    if n_pad != n:
        y = y[:n]
    return y.reshape(n, 1)


if __name__ == "__main__":
    key = jax.random.PRNGKey(0)
    kx, kw, kb, kx2 = jax.random.split(key, 4)

    # Small batch of 2-D points, consistent with the simple-2D-classifier module.
    n = 8
    x = jax.random.normal(kx, (n, 2), dtype=jnp.float32)

    # Deterministic parameter init mirroring nn.Linear(2, 1) shapes
    # (PyTorch uses uniform(-1/sqrt(fan_in), 1/sqrt(fan_in))).
    bound = 1.0 / jnp.sqrt(2.0)
    weight = jax.random.uniform(kw, (1, 2), dtype=jnp.float32, minval=-bound, maxval=bound)
    bias = jax.random.uniform(kb, (1,), dtype=jnp.float32, minval=-bound, maxval=bound)

    out = linear_classifier_forward(x, weight, bias)
    out = jax.block_until_ready(out)

    ref = jax.nn.sigmoid(x @ weight.T + bias)
    assert out.shape == (n, 1)
    assert jnp.allclose(out, ref, atol=1e-4, rtol=1e-4)

    # Extra check exercising the multi-row interleaved mapping + padding path.
    n2 = 300
    x2 = jax.random.normal(kx2, (n2, 2), dtype=jnp.float32)
    out2 = jax.block_until_ready(linear_classifier_forward(x2, weight, bias))
    ref2 = jax.nn.sigmoid(x2 @ weight.T + bias)
    assert out2.shape == (n2, 1)
    assert jnp.allclose(out2, ref2, atol=1e-4, rtol=1e-4)

    print("KERNEL_OK")
</pallas_src>

<mosaic_0001>
module attributes {stable_mosaic.version = 11 : i64} {
  func.func @_linear_sigmoid_kernel(%arg0: i32, %arg1: memref<8x256xf32, #tpu.memory_space<vmem>>, %arg2: memref<256x128xf32, #tpu.memory_space<vmem>>, %arg3: memref<1xf32, #tpu.memory_space<smem>>, %arg4: memref<8x128xf32, #tpu.memory_space<vmem>>) attributes {dimension_semantics = [#tpu.dimension_semantics<parallel>], iteration_bounds = array<i64: 1>, scalar_prefetch = 0 : i64, scratch_operands = 0 : i64, tpu.core_type = #tpu.core_type<tc>, window_params = [{transform_indices = @transform_0, window_bounds = array<i64: 8, 256>}, {pipeline_mode = #tpu.pipeline_mode<synchronous>, transform_indices = @transform_1, window_bounds = array<i64: 256, 128>}, {transform_indices = @transform_2, window_bounds = array<i64: 1>}, {transform_indices = @transform_3, window_bounds = array<i64: 8, 128>}]} {
    %c0 = arith.constant 0 : index
    %c0_0 = arith.constant 0 : index
    %0 = vector.load %arg1[%c0, %c0_0] : memref<8x256xf32, #tpu.memory_space<vmem>>, vector<8x256xf32>
    %c0_1 = arith.constant 0 : index
    %c0_2 = arith.constant 0 : index
    %1 = vector.load %arg2[%c0_1, %c0_2] : memref<256x128xf32, #tpu.memory_space<vmem>>, vector<256x128xf32>
    %cst = arith.constant dense<0.000000e+00> : vector<8x128xf32>
    %2 = tpu.matmul %0, %1, %cst {dimension_numbers = #tpu.dot_dimension_numbers<[1], [0], [0], [1], [0, 0, 1, 1], [], []>} : vector<8x256xf32>, vector<256x128xf32>, vector<8x128xf32> -> vector<8x128xf32>
    %c0_3 = arith.constant 0 : index
    %3 = memref.load %arg3[%c0_3] : memref<1xf32, #tpu.memory_space<smem>>
    %4 = vector.broadcast %3 : f32 to vector<8x128xf32>
    %5 = arith.addf %2, %4 : vector<8x128xf32>
    %cst_4 = arith.constant -8.000000e+01 : f32
    %6 = vector.broadcast %cst_4 : f32 to vector<8x128xf32>
    %7 = arith.maximumf %5, %6 : vector<8x128xf32>
    %cst_5 = arith.constant 0.000000e+00 : f32
    %8 = vector.broadcast %cst_5 : f32 to vector<8x128xf32>
    %9 = arith.subf %8, %7 : vector<8x128xf32>
    %10 = math.exp %9 : vector<8x128xf32>
    %cst_6 = arith.constant 1.000000e+00 : f32
    %11 = vector.broadcast %cst_6 : f32 to vector<8x128xf32>
    %12 = arith.addf %11, %10 : vector<8x128xf32>
    %13 = tpu.reciprocal %12 {approx = true} : vector<8x128xf32> -> vector<8x128xf32>
    %14 = arith.mulf %12, %13 : vector<8x128xf32>
    %cst_7 = arith.constant 2.000000e+00 : f32
    %15 = vector.broadcast %cst_7 : f32 to vector<8x128xf32>
    %16 = arith.subf %15, %14 : vector<8x128xf32>
    %17 = arith.mulf %13, %16 : vector<8x128xf32>
    %c0_8 = arith.constant 0 : index
    %c0_9 = arith.constant 0 : index
    %18 = vector.load %arg4[%c0_8, %c0_9] : memref<8x128xf32, #tpu.memory_space<vmem>>, vector<8x128xf32>
    tpu.vector_store %arg4[%c0_8, %c0_9], %17 {strides = array<i32>} : memref<8x128xf32, #tpu.memory_space<vmem>>, vector<8x128xf32>,
    return
  }
  func.func @transform_0(%arg0: i32) -> (i32, i32) {
    %c0_i32 = arith.constant 0 : i32
    %c0_i32_0 = arith.constant 0 : i32
    return %arg0, %c0_i32 : i32, i32
  }
  func.func @transform_1(%arg0: i32) -> (i32, i32) {
    %c0_i32 = arith.constant 0 : i32
    %c0_i32_0 = arith.constant 0 : i32
    %c0_i32_1 = arith.constant 0 : i32
    return %c0_i32, %c0_i32_0 : i32, i32
  }
  func.func @transform_2(%arg0: i32) -> i32 {
    %c0_i32 = arith.constant 0 : i32
    %c0_i32_0 = arith.constant 0 : i32
    return %c0_i32 : i32
  }
  func.func @transform_3(%arg0: i32) -> (i32, i32) {
    %c0_i32 = arith.constant 0 : i32
    %c0_i32_0 = arith.constant 0 : i32
    return %arg0, %c0_i32 : i32, i32
  }
}

</mosaic_0001>

<llo_original>
// kernel: tpu_custom_call.1
$region0: #{tpu_custom_call.1}
  #allocation0 [shape = 'u32[]', space=smem, size = 0x4, offset = 0x4, fixed_abs, tag = 'smem constant byte address 0x4 - core index']
  #allocation1 [shape = 'u32[144,128]{1,0:T(1,128)}', space=vmem, size = 0x12000, scoped, tag = 'internal scratch']
  #allocation2 [shape = 'f32[1]{0:T(128)S(6)}', space=smem, size = 0x200, scoped, tag = 'scoped memory for tpu_custom_call.1']
  %s0 = inlined_call_operand.hbm [shape: f32[8,256], index: 0, kind: input, shape index: {}]
  %s1 = inlined_call_operand.hbm [shape: f32[256,128], index: 1, kind: input, shape index: {}]
  %s2 = inlined_call_operand.<no memory space> [shape: f32[1], index: 2, kind: input, shape index: {}]
  %s3 = inlined_call_operand.hbm [shape: f32[8,128], index: 3, kind: output, shape index: {}]
  %s4 = sld [smem:[#allocation0]]
  $region30: #{tpu_custom_call.1} parent=0
    _
  %s6 = ssub.s32 1, %s4
  %s7 = scalar_select 0, %s6, %s4
  %8 = sst [smem:[#allocation2]] %s2
  $region1: #{tpu_custom_call.1} parent=0
    #allocation3 [shape = 'u8[8192]{0}', space=vmem, size = 0x2000, scoped, tag = 'input window, operand 0, single buffered']
    #allocation4 [shape = 's32[1]{0}', space=sflag, size = 0x4, scoped, tag = 'scoped memory for tpu_custom_call.1']
    #allocation5 [shape = 's32[1]{0}', space=sflag, size = 0x4, scoped, tag = 'scoped memory for tpu_custom_call.1']
    #allocation6 [shape = 'u8[131072]{0}', space=vmem, size = 0x20000, scoped, tag = 'input window, operand 1, single buffered']
    #allocation7 [shape = 's32[1]{0}', space=sflag, size = 0x4, scoped, tag = 'scoped memory for tpu_custom_call.1']
    #allocation8 [shape = 'u8[4096]{0}', space=vmem, size = 0x1000, scoped, tag = 'output window, operand 0, single buffered']
    %9 = vsyncpa [#allocation4], 0
    %10 = vsyncpa [#allocation7], 0
    %11 = vsyncpa [#allocation5], 0
    // Predicated region
    $region2: #{tpu_custom_call.1} parent=1 // pred_check
      _
    $region3: #{tpu_custom_call.1} parent=1 // pred_check_branch
      %13 = sbr.rel (0) target = $region5
    $region4: #{tpu_custom_call.1} parent=1 // pred_region
      %s15 = ssub.s32 256, 256
      %16 = vsyncadd [#allocation4], %s15
      %s18 = sshll.u32 [#allocation3], 4
      %s19 = int_to_ptr.vmem [resolvable:$true] %s18
      %21 = dma.hbm_to_vmem [thread:$0]  %s0, 256, %s19, [#allocation4]
    $region5: #{tpu_custom_call.1} parent=1 // pred_fallthru
      _
    // Predicated region
    $region6: #{tpu_custom_call.1} parent=1 // pred_check
      _
    $region7: #{tpu_custom_call.1} parent=1 // pred_check_branch
      %23 = sbr.rel (0) target = $region9
    $region8: #{tpu_custom_call.1} parent=1 // pred_region
      %s25 = ssub.s32 4096, 4096
      %26 = vsyncadd [#allocation7], %s25
      %s27 = sshll.u32 [#allocation6], 4
      %s28 = int_to_ptr.vmem [resolvable:$true] %s27
      %33 = dma.hbm_to_vmem [thread:$0]  %s1, 4096, %s28, [#allocation7], 128, 128, 8
    $region9: #{tpu_custom_call.1} parent=1 // pred_fallthru
      _
    // Predicated region
    $region10: #{tpu_custom_call.1} parent=1 // pred_check
      _
    $region11: #{tpu_custom_call.1} parent=1 // pred_check_branch
      %35 = sbr.rel (0) target = $region13
    $region12: #{tpu_custom_call.1} parent=1 // pred_region
      _
    $region13: #{tpu_custom_call.1} parent=1 // pred_fallthru
      _
    // Predicated region
    $region14: #{tpu_custom_call.1} parent=1 // pred_check
      _
    $region15: #{tpu_custom_call.1} parent=1 // pred_check_branch
      %37 = sbr.rel (0) target = $region17
    $region16: #{tpu_custom_call.1} parent=1 // pred_region
      %38 = dma.done [#allocation4], 256
    $region17: #{tpu_custom_call.1} parent=1 // pred_fallthru
      _
    // Predicated region
    $region18: #{tpu_custom_call.1} parent=1 // pred_check
      _
    $region19: #{tpu_custom_call.1} parent=1 // pred_check_branch
      %40 = sbr.rel (0) target = $region21
    $region20: #{tpu_custom_call.1} parent=1 // pred_region
      %41 = dma.done [#allocation7], 4096
    $region21: #{tpu_custom_call.1} parent=1 // pred_fallthru
      _
    %v42 = vld [vmem:[#allocation3] sm:$0xff]
    %v43 = vld [vmem:[#allocation3 + $0x8] sm:$0xff]
    %v44 = vld [vmem:[#allocation6] sm:$0xff]
    %v45 = vld [vmem:[#allocation6 + $0x8] sm:$0xff]
    %v46 = vld [vmem:[#allocation6 + $0x10] sm:$0xff]
    %v47 = vld [vmem:[#allocation6 + $0x18] sm:$0xff]
    %v48 = vld [vmem:[#allocation6 + $0x20] sm:$0xff]
    %v49 = vld [vmem:[#allocation6 + $0x28] sm:$0xff]
    %v50 = vld [vmem:[#allocation6 + $0x30] sm:$0xff]
    %v51 = vld [vmem:[#allocation6 + $0x38] sm:$0xff]
    %v52 = vld [vmem:[#allocation6 + $0x40] sm:$0xff]
    %v53 = vld [vmem:[#allocation6 + $0x48] sm:$0xff]
    %v54 = vld [vmem:[#allocation6 + $0x50] sm:$0xff]
    %v55 = vld [vmem:[#allocation6 + $0x58] sm:$0xff]
    %v56 = vld [vmem:[#allocation6 + $0x60] sm:$0xff]
    %v57 = vld [vmem:[#allocation6 + $0x68] sm:$0xff]
    %v58 = vld [vmem:[#allocation6 + $0x70] sm:$0xff]
    %v59 = vld [vmem:[#allocation6 + $0x78] sm:$0xff]
    %v60 = vld [vmem:[#allocation6 + $0x80] sm:$0xff]
    %v61 = vld [vmem:[#allocation6 + $0x88] sm:$0xff]
    %v62 = vld [vmem:[#allocation6 + $0x90] sm:$0xff]
    %v63 = vld [vmem:[#allocation6 + $0x98] sm:$0xff]
    %v64 = vld [vmem:[#allocation6 + $0xa0] sm:$0xff]
    %v65 = vld [vmem:[#allocation6 + $0xa8] sm:$0xff]
    %v66 = vld [vmem:[#allocation6 + $0xb0] sm:$0xff]
    %v67 = vld [vmem:[#allocation6 + $0xb8] sm:$0xff]
    %v68 = vld [vmem:[#allocation6 + $0xc0] sm:$0xff]
    %v69 = vld [vmem:[#allocation6 + $0xc8] sm:$0xff]
    %v70 = vld [vmem:[#allocation6 + $0xd0] sm:$0xff]
    %v71 = vld [vmem:[#allocation6 + $0xd8] sm:$0xff]
    %v72 = vld [vmem:[#allocation6 + $0xe0] sm:$0xff]
    %v73 = vld [vmem:[#allocation6 + $0xe8] sm:$0xff]
    %v74 = vld [vmem:[#allocation6 + $0xf0] sm:$0xff]
    %v75 = vld [vmem:[#allocation6 + $0xf8] sm:$0xff]
    %s76 = sld [smem:[#allocation2]]
    %v77 = vstv %s76
    %78 = vmatprep.subr.mxu0 0.0
    %79 = vmatpush1.msra.mxu0 %v59
    %80 = vmatprep.subr.mxu0 0.0
    %81 = vmatpush1.msra.mxu0 %v58
    %82 = vmatprep.subr.mxu0 0.0
    %83 = vmatpush1.msra.mxu0 %v57
    %84 = vmatprep.subr.mxu0 0.0
    %85 = vmatpush1.msra.mxu0 %v56
    %86 = vmatprep.subr.mxu0 0.0
    %87 = vmatpush1.msra.mxu0 %v55
    %88 = vmatprep.subr.mxu0 0.0
    %89 = vmatpush1.msra.mxu0 %v54
    %90 = vmatprep.subr.mxu0 0.0
    %91 = vmatpush1.msra.mxu0 %v53
    %92 = vmatprep.subr.mxu0 0.0
    %93 = vmatpush1.msra.mxu0 %v52
    %94 = vmatprep.subr.mxu0 0.0
    %95 = vmatpush1.msra.mxu0 %v51
    %96 = vmatprep.subr.mxu0 0.0
    %97 = vmatpush1.msra.mxu0 %v50
    %98 = vmatprep.subr.mxu0 0.0
    %99 = vmatpush1.msra.mxu0 %v49
    %100 = vmatprep.subr.mxu0 0.0
    %101 = vmatpush1.msra.mxu0 %v48
    %102 = vmatprep.subr.mxu0 0.0
    %103 = vmatpush1.msra.mxu0 %v47
    %104 = vmatprep.subr.mxu0 0.0
    %105 = vmatpush1.msra.mxu0 %v46
    %106 = vmatprep.subr.mxu0 0.0
    %107 = vmatpush1.msra.mxu0 %v45
    %108 = vmatprep.subr.mxu0 0.0
    %109 = vmatpush1.msra.mxu0 %v44
    %110 = vmatprep.subr.mxu0 0.0
    %111 = vmatpush2.msra.mxu0 %v75
    %112 = vmatprep.subr.mxu0 0.0
    %113 = vmatpush2.msra.mxu0 %v74
    %114 = vmatprep.subr.mxu0 0.0
    %115 = vmatpush2.msra.mxu0 %v73
    %116 = vmatprep.subr.mxu0 0.0
    %117 = vmatpush2.msra.mxu0 %v72
    %118 = vmatprep.subr.mxu0 0.0
    %119 = vmatpush2.msra.mxu0 %v71
    %120 = vmatprep.subr.mxu0 0.0
    %121 = vmatpush2.msra.mxu0 %v70
    %122 = vmatprep.subr.mxu0 0.0
    %123 = vmatpush2.msra.mxu0 %v69
    %124 = vmatprep.subr.mxu0 0.0
    %125 = vmatpush2.msra.mxu0 %v68
    %126 = vmatprep.subr.mxu0 0.0
    %127 = vmatpush2.msra.mxu0 %v67
    %128 = vmatprep.subr.mxu0 0.0
    %129 = vmatpush2.msra.mxu0 %v66
    %130 = vmatprep.subr.mxu0 0.0
    %131 = vmatpush2.msra.mxu0 %v65
    %132 = vmatprep.subr.mxu0 0.0
    %133 = vmatpush2.msra.mxu0 %v64
    %134 = vmatprep.subr.mxu0 0.0
    %135 = vmatpush2.msra.mxu0 %v63
    %136 = vmatprep.subr.mxu0 0.0
    %137 = vmatpush2.msra.mxu0 %v62
    %138 = vmatprep.subr.mxu0 0.0
    %139 = vmatpush2.msra.mxu0 %v61
    %140 = vmatprep.subr.mxu0 0.0
    %141 = vmatpush2.msra.mxu0 %v60
    %142 = vmatprep.mubr.f32.mxu0 %v43
    %143 = vmatmul.mubr.f32.gmra.mxu0 %v42
    %v144 = vpop.f32.mrf.mxu0
    %v145 = vadd.f32 %v77, %v144
    %v146 = vpop.f32.mrf.mxu0
    %147 = vdwg.mxu0
    %v148 = vmax.f32 %v145, -80.0
    %v149 = vsub.f32 0.0, %v148
    %v150 = vmul.f32 %v149, 1.442695
    %v151 = vpow.pop %v150
    %v152 = vadd.f32 %v151, 1.0
    %v153 = vrcp.pop %v152
    %v154 = vmul.f32 %v152, %v153
    %v155 = vsub.f32 2.0, %v154
    %v156 = vmul.f32 %v153, %v155
    %157 = vst [vmem:[#allocation8] sm:$0xff] %v156
    // Predicated region
    $region22: #{tpu_custom_call.1} parent=1 // pred_check
      _
    $region23: #{tpu_custom_call.1} parent=1 // pred_check_branch
      %159 = sbr.rel (0) target = $region25
    $region24: #{tpu_custom_call.1} parent=1 // pred_region
      %s161 = ssub.s32 128, 128
      %162 = vsyncadd [#allocation5], %s161
      %s164 = sshll.u32 [#allocation8], 4
      %s165 = int_to_ptr.vmem [resolvable:$true] %s164
      %167 = dma.vmem_to_hbm [thread:$0]  %s165, 128, %s3, [#allocation5]
    $region25: #{tpu_custom_call.1} parent=1 // pred_fallthru
      _
    // Predicated region
    $region26: #{tpu_custom_call.1} parent=1 // pred_check
      _
    $region27: #{tpu_custom_call.1} parent=1 // pred_check_branch
      %169 = sbr.rel (0) target = $region29
    $region28: #{tpu_custom_call.1} parent=1 // pred_region
      %170 = dma.done [#allocation5], 128
    $region29: #{tpu_custom_call.1} parent=1 // pred_fallthru
      _
    %171 = vsyncpa [#allocation4], 1
    %172 = vsyncpa [#allocation7], 1
    %173 = vsyncpa [#allocation5], 1

</llo_original>
